<compile_context>
chip_gen: v5e
topology: v5e:2x2
jax: 0.10.0
libtpu: 0.0.40
codegen_flags: <defaults>
</compile_context>

<pallas_src>
import jax
import jax.numpy as jnp
from jax.experimental import pallas as pl
from jax.experimental.pallas import tpu as pltpu

EPS = 1e-5
LANES = 128
NEG_INF = -1e30  # padding value for b4 lanes 5..127 (exp underflows to exactly 0)

# (in_features, out_features) of dense_1..dense_4
DIMS = [(16, 64), (64, 32), (32, 32), (32, 5)]
N_OUT = DIMS[-1][1]

# slab layout (rows):
#   [0:128)    w1 zero-padded to (128,128)
#   [128:256)  w2
#   [256:384)  w3
#   [384:512)  w4
#   512 g1, 513 be1, 514 g2, 515 be2, 516 g3, 517 be3, 518 b4(-1e30-padded), 519 zero-pad
W_BASE = [0, 128, 256, 384]
V_BASE = 4 * LANES          # 512
SLAB_ROWS = V_BASE + 8      # 520 (multiple of 8 sublanes)


def _bn_relu(h, gamma, beta):
    # PyTorch training-mode BatchNorm1d: batch mean + biased batch variance over
    # axis 0, eps=1e-5. `centered` reused; gamma folded into the (1,F) scale.
    mean = jnp.mean(h, axis=0, keepdims=True)
    centered = h - mean
    var = jnp.mean(centered * centered, axis=0, keepdims=True)
    scale = gamma * jax.lax.rsqrt(var + EPS)          # (1,128) row op (EUP rsqrt)
    return jnp.maximum(centered * scale + beta, 0.0)  # padded lanes stay exactly 0


def three_layer_bn_kernel(x_ref, slab_ref, o_ref):
    h = x_ref[...]                                    # (B, 128) lane-dense

    # layer 1: Linear(16 -> 64) + BN + ReLU   (b1 cancelled by BN mean-sub)
    h = jnp.dot(h, slab_ref[W_BASE[0]:W_BASE[0] + LANES, :],
                preferred_element_type=jnp.float32)
    h = _bn_relu(h, slab_ref[V_BASE + 0:V_BASE + 1, :], slab_ref[V_BASE + 1:V_BASE + 2, :])

    # layer 2: Linear(64 -> 32) + BN + ReLU
    h = jnp.dot(h, slab_ref[W_BASE[1]:W_BASE[1] + LANES, :],
                preferred_element_type=jnp.float32)
    h = _bn_relu(h, slab_ref[V_BASE + 2:V_BASE + 3, :], slab_ref[V_BASE + 3:V_BASE + 4, :])

    # layer 3: Linear(32 -> 32) + BN + ReLU
    h = jnp.dot(h, slab_ref[W_BASE[2]:W_BASE[2] + LANES, :],
                preferred_element_type=jnp.float32)
    h = _bn_relu(h, slab_ref[V_BASE + 4:V_BASE + 5, :], slab_ref[V_BASE + 5:V_BASE + 6, :])

    # layer 4: Linear(32 -> 5) + Softmax(dim=1), lane-dense.
    # b4 lanes 5..127 hold -1e30 -> padded logits underflow to exp(...) == 0,
    # so the row max / sum are unaffected and the padded output lanes are 0.
    logits = jnp.dot(h, slab_ref[W_BASE[3]:W_BASE[3] + LANES, :],
                     preferred_element_type=jnp.float32) + slab_ref[V_BASE + 6:V_BASE + 7, :]
    m = jnp.max(logits, axis=1, keepdims=True)
    e = jnp.exp(logits - m)
    denom = jnp.sum(e, axis=1, keepdims=True)
    # exact divide: approx reciprocal can violate the 1e-5 sum-to-1 tolerance
    o_ref[...] = (e / denom).astype(o_ref.dtype)


def pack_params(params):
    """Pack all 10 live parameter tensors into one lane-dense (520,128) f32 slab
    (built once in JAX, statically sliced inside the kernel)."""
    blocks = []
    for i, (fan_in, fan_out) in enumerate(DIMS, start=1):
        w = params[f"w{i}"]                           # (fan_in, fan_out)
        blocks.append(jnp.pad(w, ((0, LANES - fan_in), (0, LANES - fan_out))))

    def row(v, fill=0.0):
        return jnp.pad(v, ((0, 0), (0, LANES - v.shape[1])), constant_values=fill)

    rows = [
        row(params["g1"]), row(params["be1"]),
        row(params["g2"]), row(params["be2"]),
        row(params["g3"]), row(params["be3"]),
        row(params["b4"], fill=NEG_INF),              # -inf-like padding for softmax
        jnp.zeros((1, LANES), jnp.float32),           # pad to 8 sublanes
    ]
    slab = jnp.concatenate(blocks + rows, axis=0)     # (520, 128)
    assert slab.shape == (SLAB_ROWS, LANES)
    return slab


def three_layer_bn_forward(x, slab):
    B, F_in = x.shape
    # lane-dense input: one contiguous (B,128) tile, no masked vld in layer 1
    x_pad = jnp.pad(x, ((0, 0), (0, LANES - F_in)))

    flops = 2 * B * sum(fi * fo for fi, fo in DIMS)
    transcendentals = (64 + 32 + 32) + B * LANES      # rsqrt per feature + exp
    bytes_accessed = 4 * (x_pad.size + slab.size + B * LANES)

    vmem_spec = pl.BlockSpec(memory_space=pltpu.VMEM)
    out_pad = pl.pallas_call(
        three_layer_bn_kernel,
        out_shape=jax.ShapeDtypeStruct((B, LANES), jnp.float32),
        in_specs=[vmem_spec, vmem_spec],
        out_specs=vmem_spec,
        cost_estimate=pl.CostEstimate(
            flops=flops,
            transcendentals=transcendentals,
            bytes_accessed=bytes_accessed,
        ),
    )(x_pad, slab)
    # lane-dense (B,128) store inside the kernel; narrow slice done by XLA here
    return out_pad[:, :N_OUT]


def init_params(key):
    """Deterministic synthetic params. Linear weights ~ xavier-normal with ReLU
    gain; biases small; BN gamma=1, beta=0 (PyTorch defaults at construction)."""
    params = {}
    keys = jax.random.split(key, 2 * len(DIMS))
    gain = jnp.sqrt(2.0)  # calculate_gain('relu')
    for i, (fan_in, fan_out) in enumerate(DIMS, start=1):
        std = gain * jnp.sqrt(2.0 / (fan_in + fan_out))
        # stored transposed vs. PyTorch: (in_features, out_features)
        params[f"w{i}"] = (
            std * jax.random.normal(keys[2 * (i - 1)], (fan_in, fan_out), jnp.float32)
        )
        params[f"b{i}"] = 0.01 * jax.random.normal(
            keys[2 * (i - 1) + 1], (1, fan_out), jnp.float32
        )
    for i, (_, fan_out) in enumerate(DIMS[:3], start=1):
        params[f"g{i}"] = jnp.ones((1, fan_out), jnp.float32)
        params[f"be{i}"] = jnp.zeros((1, fan_out), jnp.float32)
    return params


def reference_forward(x, params):
    """Pure-JAX reference of the PyTorch forward (keeps the b1..b3 adds that the
    kernel drops — they cancel under BN, so results agree to fp rounding)."""
    h = x
    for i in range(1, 4):
        h = h @ params[f"w{i}"] + params[f"b{i}"]
        mean = jnp.mean(h, axis=0, keepdims=True)
        var = jnp.mean((h - mean) ** 2, axis=0, keepdims=True)
        h = (h - mean) / jnp.sqrt(var + EPS)
        h = jnp.maximum(h * params[f"g{i}"] + params[f"be{i}"], 0.0)
    logits = h @ params["w4"] + params["b4"]
    return jax.nn.softmax(logits, axis=1)


if __name__ == "__main__":
    key = jax.random.PRNGKey(0)
    pkey, xkey = jax.random.split(key)
    params = init_params(pkey)
    slab = pack_params(params)

    B = 8  # small batch; input feature dim is fixed at 16 by the module
    x = jax.random.normal(xkey, (B, 16), jnp.float32)

    out = three_layer_bn_forward(x, slab)
    out = jax.block_until_ready(out)

    ref = reference_forward(x, params)
    assert out.shape == (B, N_OUT)
    assert jnp.allclose(jnp.sum(out, axis=1), 1.0, atol=1e-5)
    assert jnp.allclose(out, ref, atol=5e-5, rtol=5e-5)

    print("KERNEL_OK")
</pallas_src>

<mosaic_0001>
module attributes {stable_mosaic.version = 11 : i64} {
  func.func @three_layer_bn_kernel(%arg0: memref<8x128xf32, #tpu.memory_space<vmem>>, %arg1: memref<520x128xf32, #tpu.memory_space<vmem>>, %arg2: memref<8x128xf32, #tpu.memory_space<vmem>>) attributes {dimension_semantics = [], scalar_prefetch = 0 : i64, scratch_operands = 0 : i64, tpu.core_type = #tpu.core_type<tc>} {
    %c0 = arith.constant 0 : index
    %c0_0 = arith.constant 0 : index
    %0 = vector.load %arg0[%c0, %c0_0] : memref<8x128xf32, #tpu.memory_space<vmem>>, vector<8x128xf32>
    %c0_1 = arith.constant 0 : index
    %c0_2 = arith.constant 0 : index
    %1 = vector.load %arg1[%c0_1, %c0_2] : memref<520x128xf32, #tpu.memory_space<vmem>>, vector<128x128xf32>
    %cst = arith.constant dense<0.000000e+00> : vector<8x128xf32>
    %2 = tpu.matmul %0, %1, %cst {dimension_numbers = #tpu.dot_dimension_numbers<[1], [0], [0], [1], [0, 0, 1, 1], [], []>} : vector<8x128xf32>, vector<128x128xf32>, vector<8x128xf32> -> vector<8x128xf32>
    %c512 = arith.constant 512 : index
    %c0_3 = arith.constant 0 : index
    %3 = vector.load %arg1[%c512, %c0_3] : memref<520x128xf32, #tpu.memory_space<vmem>>, vector<1x128xf32>
    %c513 = arith.constant 513 : index
    %c0_4 = arith.constant 0 : index
    %4 = vector.load %arg1[%c513, %c0_4] : memref<520x128xf32, #tpu.memory_space<vmem>>, vector<1x128xf32>
    %cst_5 = arith.constant dense<0.000000e+00> : vector<128xf32>
    %5 = vector.multi_reduction <add>, %2, %cst_5 [0] : vector<8x128xf32> to vector<128xf32>
    %6 = vector.shape_cast %5 : vector<128xf32> to vector<1x128xf32>
    %cst_6 = arith.constant 8.000000e+00 : f32
    %7 = vector.broadcast %cst_6 : f32 to vector<1x128xf32>
    %8 = arith.divf %6, %7 : vector<1x128xf32>
    %9 = vector.broadcast %8 : vector<1x128xf32> to vector<8x128xf32>
    %10 = arith.subf %2, %9 : vector<8x128xf32>
    %11 = arith.mulf %10, %10 : vector<8x128xf32>
    %cst_7 = arith.constant dense<0.000000e+00> : vector<128xf32>
    %12 = vector.multi_reduction <add>, %11, %cst_7 [0] : vector<8x128xf32> to vector<128xf32>
    %13 = vector.shape_cast %12 : vector<128xf32> to vector<1x128xf32>
    %cst_8 = arith.constant 8.000000e+00 : f32
    %14 = vector.broadcast %cst_8 : f32 to vector<1x128xf32>
    %15 = arith.divf %13, %14 : vector<1x128xf32>
    %cst_9 = arith.constant 9.99999974E-6 : f32
    %16 = vector.broadcast %cst_9 : f32 to vector<1x128xf32>
    %17 = arith.addf %15, %16 : vector<1x128xf32>
    %18 = math.rsqrt %17 : vector<1x128xf32>
    %19 = arith.mulf %3, %18 : vector<1x128xf32>
    %20 = vector.broadcast %19 : vector<1x128xf32> to vector<8x128xf32>
    %21 = arith.mulf %10, %20 : vector<8x128xf32>
    %22 = vector.broadcast %4 : vector<1x128xf32> to vector<8x128xf32>
    %23 = arith.addf %21, %22 : vector<8x128xf32>
    %cst_10 = arith.constant 0.000000e+00 : f32
    %24 = vector.broadcast %cst_10 : f32 to vector<8x128xf32>
    %25 = arith.maximumf %23, %24 : vector<8x128xf32>
    %c128 = arith.constant 128 : index
    %c0_11 = arith.constant 0 : index
    %26 = vector.load %arg1[%c128, %c0_11] : memref<520x128xf32, #tpu.memory_space<vmem>>, vector<128x128xf32>
    %cst_12 = arith.constant dense<0.000000e+00> : vector<8x128xf32>
    %27 = tpu.matmul %25, %26, %cst_12 {dimension_numbers = #tpu.dot_dimension_numbers<[1], [0], [0], [1], [0, 0, 1, 1], [], []>} : vector<8x128xf32>, vector<128x128xf32>, vector<8x128xf32> -> vector<8x128xf32>
    %c514 = arith.constant 514 : index
    %c0_13 = arith.constant 0 : index
    %28 = vector.load %arg1[%c514, %c0_13] : memref<520x128xf32, #tpu.memory_space<vmem>>, vector<1x128xf32>
    %c515 = arith.constant 515 : index
    %c0_14 = arith.constant 0 : index
    %29 = vector.load %arg1[%c515, %c0_14] : memref<520x128xf32, #tpu.memory_space<vmem>>, vector<1x128xf32>
    %cst_15 = arith.constant dense<0.000000e+00> : vector<128xf32>
    %30 = vector.multi_reduction <add>, %27, %cst_15 [0] : vector<8x128xf32> to vector<128xf32>
    %31 = vector.shape_cast %30 : vector<128xf32> to vector<1x128xf32>
    %cst_16 = arith.constant 8.000000e+00 : f32
    %32 = vector.broadcast %cst_16 : f32 to vector<1x128xf32>
    %33 = arith.divf %31, %32 : vector<1x128xf32>
    %34 = vector.broadcast %33 : vector<1x128xf32> to vector<8x128xf32>
    %35 = arith.subf %27, %34 : vector<8x128xf32>
    %36 = arith.mulf %35, %35 : vector<8x128xf32>
    %cst_17 = arith.constant dense<0.000000e+00> : vector<128xf32>
    %37 = vector.multi_reduction <add>, %36, %cst_17 [0] : vector<8x128xf32> to vector<128xf32>
    %38 = vector.shape_cast %37 : vector<128xf32> to vector<1x128xf32>
    %cst_18 = arith.constant 8.000000e+00 : f32
    %39 = vector.broadcast %cst_18 : f32 to vector<1x128xf32>
    %40 = arith.divf %38, %39 : vector<1x128xf32>
    %cst_19 = arith.constant 9.99999974E-6 : f32
    %41 = vector.broadcast %cst_19 : f32 to vector<1x128xf32>
    %42 = arith.addf %40, %41 : vector<1x128xf32>
    %43 = math.rsqrt %42 : vector<1x128xf32>
    %44 = arith.mulf %28, %43 : vector<1x128xf32>
    %45 = vector.broadcast %44 : vector<1x128xf32> to vector<8x128xf32>
    %46 = arith.mulf %35, %45 : vector<8x128xf32>
    %47 = vector.broadcast %29 : vector<1x128xf32> to vector<8x128xf32>
    %48 = arith.addf %46, %47 : vector<8x128xf32>
    %cst_20 = arith.constant 0.000000e+00 : f32
    %49 = vector.broadcast %cst_20 : f32 to vector<8x128xf32>
    %50 = arith.maximumf %48, %49 : vector<8x128xf32>
    %c256 = arith.constant 256 : index
    %c0_21 = arith.constant 0 : index
    %51 = vector.load %arg1[%c256, %c0_21] : memref<520x128xf32, #tpu.memory_space<vmem>>, vector<128x128xf32>
    %cst_22 = arith.constant dense<0.000000e+00> : vector<8x128xf32>
    %52 = tpu.matmul %50, %51, %cst_22 {dimension_numbers = #tpu.dot_dimension_numbers<[1], [0], [0], [1], [0, 0, 1, 1], [], []>} : vector<8x128xf32>, vector<128x128xf32>, vector<8x128xf32> -> vector<8x128xf32>
    %c516 = arith.constant 516 : index
    %c0_23 = arith.constant 0 : index
    %53 = vector.load %arg1[%c516, %c0_23] : memref<520x128xf32, #tpu.memory_space<vmem>>, vector<1x128xf32>
    %c517 = arith.constant 517 : index
    %c0_24 = arith.constant 0 : index
    %54 = vector.load %arg1[%c517, %c0_24] : memref<520x128xf32, #tpu.memory_space<vmem>>, vector<1x128xf32>
    %cst_25 = arith.constant dense<0.000000e+00> : vector<128xf32>
    %55 = vector.multi_reduction <add>, %52, %cst_25 [0] : vector<8x128xf32> to vector<128xf32>
    %56 = vector.shape_cast %55 : vector<128xf32> to vector<1x128xf32>
    %cst_26 = arith.constant 8.000000e+00 : f32
    %57 = vector.broadcast %cst_26 : f32 to vector<1x128xf32>
    %58 = arith.divf %56, %57 : vector<1x128xf32>
    %59 = vector.broadcast %58 : vector<1x128xf32> to vector<8x128xf32>
    %60 = arith.subf %52, %59 : vector<8x128xf32>
    %61 = arith.mulf %60, %60 : vector<8x128xf32>
    %cst_27 = arith.constant dense<0.000000e+00> : vector<128xf32>
    %62 = vector.multi_reduction <add>, %61, %cst_27 [0] : vector<8x128xf32> to vector<128xf32>
    %63 = vector.shape_cast %62 : vector<128xf32> to vector<1x128xf32>
    %cst_28 = arith.constant 8.000000e+00 : f32
    %64 = vector.broadcast %cst_28 : f32 to vector<1x128xf32>
    %65 = arith.divf %63, %64 : vector<1x128xf32>
    %cst_29 = arith.constant 9.99999974E-6 : f32
    %66 = vector.broadcast %cst_29 : f32 to vector<1x128xf32>
    %67 = arith.addf %65, %66 : vector<1x128xf32>
    %68 = math.rsqrt %67 : vector<1x128xf32>
    %69 = arith.mulf %53, %68 : vector<1x128xf32>
    %70 = vector.broadcast %69 : vector<1x128xf32> to vector<8x128xf32>
    %71 = arith.mulf %60, %70 : vector<8x128xf32>
    %72 = vector.broadcast %54 : vector<1x128xf32> to vector<8x128xf32>
    %73 = arith.addf %71, %72 : vector<8x128xf32>
    %cst_30 = arith.constant 0.000000e+00 : f32
    %74 = vector.broadcast %cst_30 : f32 to vector<8x128xf32>
    %75 = arith.maximumf %73, %74 : vector<8x128xf32>
    %c384 = arith.constant 384 : index
    %c0_31 = arith.constant 0 : index
    %76 = vector.load %arg1[%c384, %c0_31] : memref<520x128xf32, #tpu.memory_space<vmem>>, vector<128x128xf32>
    %cst_32 = arith.constant dense<0.000000e+00> : vector<8x128xf32>
    %77 = tpu.matmul %75, %76, %cst_32 {dimension_numbers = #tpu.dot_dimension_numbers<[1], [0], [0], [1], [0, 0, 1, 1], [], []>} : vector<8x128xf32>, vector<128x128xf32>, vector<8x128xf32> -> vector<8x128xf32>
    %c518 = arith.constant 518 : index
    %c0_33 = arith.constant 0 : index
    %78 = vector.load %arg1[%c518, %c0_33] : memref<520x128xf32, #tpu.memory_space<vmem>>, vector<1x128xf32>
    %79 = vector.broadcast %78 : vector<1x128xf32> to vector<8x128xf32>
    %80 = arith.addf %77, %79 : vector<8x128xf32>
    %cst_34 = arith.constant dense<0xFF800000> : vector<8xf32>
    %81 = vector.multi_reduction <maximumf>, %80, %cst_34 [1] : vector<8x128xf32> to vector<8xf32>
    %82 = vector.shape_cast %81 : vector<8xf32> to vector<8x1xf32>
    %83 = vector.broadcast %82 : vector<8x1xf32> to vector<8x128xf32>
    %84 = arith.subf %80, %83 : vector<8x128xf32>
    %85 = math.exp %84 : vector<8x128xf32>
    %cst_35 = arith.constant dense<0.000000e+00> : vector<8xf32>
    %86 = vector.multi_reduction <add>, %85, %cst_35 [1] : vector<8x128xf32> to vector<8xf32>
    %87 = vector.shape_cast %86 : vector<8xf32> to vector<8x1xf32>
    %88 = vector.broadcast %87 : vector<8x1xf32> to vector<8x128xf32>
    %89 = arith.divf %85, %88 : vector<8x128xf32>
    %c0_36 = arith.constant 0 : index
    %c0_37 = arith.constant 0 : index
    %90 = vector.load %arg2[%c0_36, %c0_37] : memref<8x128xf32, #tpu.memory_space<vmem>>, vector<8x128xf32>
    tpu.vector_store %arg2[%c0_36, %c0_37], %89 {strides = array<i32>} : memref<8x128xf32, #tpu.memory_space<vmem>>, vector<8x128xf32>,
    return
  }
}

</mosaic_0001>

<llo_original>
// kernel: tpu_custom_call.1
$region0: #{tpu_custom_call.1}
  #allocation0 [shape = 'u32[]', space=smem, size = 0x4, offset = 0x4, fixed_abs, tag = 'smem constant byte address 0x4 - core index']
  #allocation1 [shape = 'u32[72,128]{1,0:T(1,128)}', space=vmem, size = 0x9000, scoped, tag = 'internal scratch']
  %s0 = inlined_call_operand.hbm [shape: f32[8,128], index: 0, kind: input, shape index: {}]
  %s1 = inlined_call_operand.hbm [shape: f32[520,128], index: 1, kind: input, shape index: {}]
  %s2 = inlined_call_operand.hbm [shape: f32[8,128], index: 2, kind: output, shape index: {}]
  %s3 = sld [smem:[#allocation0]]
  $region26: #{tpu_custom_call.1} parent=0
    _
  %s5 = ssub.s32 1, %s3
  %s6 = scalar_select 0, %s5, %s3
  $region1: #{tpu_custom_call.1} parent=0
    #allocation2 [shape = 'u8[4096]{0}', space=vmem, size = 0x1000, scoped, tag = 'input window, operand 0, single buffered']
    #allocation3 [shape = 's32[1]{0}', space=sflag, size = 0x4, scoped, tag = 'scoped memory for tpu_custom_call.1']
    #allocation4 [shape = 's32[1]{0}', space=sflag, size = 0x4, scoped, tag = 'scoped memory for tpu_custom_call.1']
    #allocation5 [shape = 'u8[266240]{0}', space=vmem, size = 0x41000, scoped, tag = 'input window, operand 1, single buffered']
    #allocation6 [shape = 's32[1]{0}', space=sflag, size = 0x4, scoped, tag = 'scoped memory for tpu_custom_call.1']
    #allocation7 [shape = 'u8[4096]{0}', space=vmem, size = 0x1000, scoped, tag = 'output window, operand 0, single buffered']
    %7 = vsyncpa [#allocation3], 0
    %8 = vsyncpa [#allocation6], 0
    %9 = vsyncpa [#allocation4], 0
    // Predicated region
    $region2: #{tpu_custom_call.1} parent=1 // pred_check
      _
    $region3: #{tpu_custom_call.1} parent=1 // pred_check_branch
      %11 = sbr.rel (0) target = $region5
    $region4: #{tpu_custom_call.1} parent=1 // pred_region
      %13 = vsyncadd [#allocation3], 0
      %s15 = sshll.u32 %s0, 4
      %s16 = int_to_ptr.hbm [resolvable:$true] %s15
      %s17 = sshll.u32 [#allocation2], 4
      %s18 = int_to_ptr.vmem [resolvable:$true] %s17
      %20 = dma.hbm_to_vmem [thread:$0]  %s16, 128, %s18, [#allocation3]
    $region5: #{tpu_custom_call.1} parent=1 // pred_fallthru
      _
    // Predicated region
    $region6: #{tpu_custom_call.1} parent=1 // pred_check
      _
    $region7: #{tpu_custom_call.1} parent=1 // pred_check_branch
      %22 = sbr.rel (0) target = $region9
    $region8: #{tpu_custom_call.1} parent=1 // pred_region
      %24 = vsyncadd [#allocation6], 0
      %s25 = sshll.u32 %s1, 4
      %s26 = int_to_ptr.hbm [resolvable:$true] %s25
      %s27 = sshll.u32 [#allocation5], 4
      %s28 = int_to_ptr.vmem [resolvable:$true] %s27
      %33 = dma.hbm_to_vmem [thread:$0]  %s26, 8320, %s28, [#allocation6], 128, 128, 8
    $region9: #{tpu_custom_call.1} parent=1 // pred_fallthru
      _
    // Predicated region
    $region10: #{tpu_custom_call.1} parent=1 // pred_check
      _
    $region11: #{tpu_custom_call.1} parent=1 // pred_check_branch
      %35 = sbr.rel (0) target = $region13
    $region12: #{tpu_custom_call.1} parent=1 // pred_region
      %37 = dma.done [#allocation3], 128
    $region13: #{tpu_custom_call.1} parent=1 // pred_fallthru
      _
    // Predicated region
    $region14: #{tpu_custom_call.1} parent=1 // pred_check
      _
    $region15: #{tpu_custom_call.1} parent=1 // pred_check_branch
      %39 = sbr.rel (0) target = $region17
    $region16: #{tpu_custom_call.1} parent=1 // pred_region
      %41 = dma.done [#allocation6], 8320
    $region17: #{tpu_custom_call.1} parent=1 // pred_fallthru
      _
    %v42 = vld [vmem:[#allocation2] sm:$0xff]
    %v43 = vld [vmem:[#allocation5] sm:$0xff]
    %v44 = vld [vmem:[#allocation5 + $0x8] sm:$0xff]
    %v45 = vld [vmem:[#allocation5 + $0x10] sm:$0xff]
    %v46 = vld [vmem:[#allocation5 + $0x18] sm:$0xff]
    %v47 = vld [vmem:[#allocation5 + $0x20] sm:$0xff]
    %v48 = vld [vmem:[#allocation5 + $0x28] sm:$0xff]
    %v49 = vld [vmem:[#allocation5 + $0x30] sm:$0xff]
    %v50 = vld [vmem:[#allocation5 + $0x38] sm:$0xff]
    %v51 = vld [vmem:[#allocation5 + $0x40] sm:$0xff]
    %v52 = vld [vmem:[#allocation5 + $0x48] sm:$0xff]
    %v53 = vld [vmem:[#allocation5 + $0x50] sm:$0xff]
    %v54 = vld [vmem:[#allocation5 + $0x58] sm:$0xff]
    %v55 = vld [vmem:[#allocation5 + $0x60] sm:$0xff]
    %v56 = vld [vmem:[#allocation5 + $0x68] sm:$0xff]
    %v57 = vld [vmem:[#allocation5 + $0x70] sm:$0xff]
    %v58 = vld [vmem:[#allocation5 + $0x78] sm:$0xff]
    %59 = vmatpush.msra.mxu0 %v58
    %60 = vmatpush.msra.mxu0 %v57
    %61 = vmatpush.msra.mxu0 %v56
    %62 = vmatpush.msra.mxu0 %v55
    %63 = vmatpush.msra.mxu0 %v54
    %64 = vmatpush.msra.mxu0 %v53
    %65 = vmatpush.msra.mxu0 %v52
    %66 = vmatpush.msra.mxu0 %v51
    %67 = vmatpush.msra.mxu0 %v50
    %68 = vmatpush.msra.mxu0 %v49
    %69 = vmatpush.msra.mxu0 %v48
    %70 = vmatpush.msra.mxu0 %v47
    %71 = vmatpush.msra.mxu0 %v46
    %72 = vmatpush.msra.mxu0 %v45
    %73 = vmatpush.msra.mxu0 %v44
    %74 = vmatpush.msra.mxu0 %v43
    %75 = vmatmul.f32.gmra.mxu0 %v42
    %v76 = vpop.f32.mrf.mxu0
    %v77 = vadd.f32 0.0, %v76
    %78 = vdwg.mxu0
    %v79 = vld [vmem:[#allocation5 + $0x200] sm:$0x1]
    %v80 = vld [vmem:[#allocation5 + $0x201] sm:$0x1]
    %v81 = vrot.slane %v77, 4
    %v82 = vadd.f32 %v77, %v81
    %v83 = vrot.slane %v82, 2
    %v84 = vadd.f32 %v82, %v83
    %v85 = vrot.slane %v84, 1
    %v86 = vadd.f32 %v84, %v85
    %v87 = vrcp.pop 8.0
    %v88 = vmul.f32 8.0, %v87
    %v89 = vsub.f32 1.0, %v88
    %v90 = vmul.f32 %v87, %v89
    %v91 = vadd.f32 %v87, %v90
    %vm92 = vweird.f32 %v87
    %v93 = vsel %vm92, %v87, %v91
    %v94 = vmul.f32 %v86, %v93
    %v95 = vsub.f32 %v77, %v94
    %v96 = vmul.f32 %v95, %v95
    %v97 = vrot.slane %v96, 4
    %v98 = vadd.f32 %v96, %v97
    %v99 = vrot.slane %v98, 2
    %v100 = vadd.f32 %v98, %v99
    %v101 = vrot.slane %v100, 1
    %v102 = vadd.f32 %v100, %v101
    %v103 = vmul.f32 %v102, %v93
    %v104 = vadd.f32 %v103, 1e-05
    %v105 = vrsqrt.pop %v104
    %v106 = vmul.f32 %v105, %v104
    %v107 = vmul.f32 %v106, %v105
    %v108 = vmul.f32 0.5, %v107
    %v109 = vsub.f32 1.5, %v108
    %v110 = vmul.f32 %v105, %v109
    %vm111 = vweird.f32 %v104
    %vm112 = vweird.f32 %v105
    %vm113 = vmor %vm111, %vm112
    %v114 = vsel %vm113, %v105, %v110
    %v115 = vmul.f32 %v79, %v114
    %v116 = vperm.slane %v115, 0
    %v117 = vmul.f32 %v95, %v116
    %v118 = vperm.slane %v80, 0
    %v119 = vadd.f32 %v117, %v118
    %v120 = vmax.f32 %v119, 0.0
    %v121 = vld [vmem:[#allocation5 + $0x80] sm:$0xff]
    %v122 = vld [vmem:[#allocation5 + $0x88] sm:$0xff]
    %v123 = vld [vmem:[#allocation5 + $0x90] sm:$0xff]
    %v124 = vld [vmem:[#allocation5 + $0x98] sm:$0xff]
    %v125 = vld [vmem:[#allocation5 + $0xa0] sm:$0xff]
    %v126 = vld [vmem:[#allocation5 + $0xa8] sm:$0xff]
    %v127 = vld [vmem:[#allocation5 + $0xb0] sm:$0xff]
    %v128 = vld [vmem:[#allocation5 + $0xb8] sm:$0xff]
    %v129 = vld [vmem:[#allocation5 + $0xc0] sm:$0xff]
    %v130 = vld [vmem:[#allocation5 + $0xc8] sm:$0xff]
    %v131 = vld [vmem:[#allocation5 + $0xd0] sm:$0xff]
    %v132 = vld [vmem:[#allocation5 + $0xd8] sm:$0xff]
    %v133 = vld [vmem:[#allocation5 + $0xe0] sm:$0xff]
    %v134 = vld [vmem:[#allocation5 + $0xe8] sm:$0xff]
    %v135 = vld [vmem:[#allocation5 + $0xf0] sm:$0xff]
    %v136 = vld [vmem:[#allocation5 + $0xf8] sm:$0xff]
    %137 = vmatpush.msra.mxu0 %v136
    %138 = vmatpush.msra.mxu0 %v135
    %139 = vmatpush.msra.mxu0 %v134
    %140 = vmatpush.msra.mxu0 %v133
    %141 = vmatpush.msra.mxu0 %v132
    %142 = vmatpush.msra.mxu0 %v131
    %143 = vmatpush.msra.mxu0 %v130
    %144 = vmatpush.msra.mxu0 %v129
    %145 = vmatpush.msra.mxu0 %v128
    %146 = vmatpush.msra.mxu0 %v127
    %147 = vmatpush.msra.mxu0 %v126
    %148 = vmatpush.msra.mxu0 %v125
    %149 = vmatpush.msra.mxu0 %v124
    %150 = vmatpush.msra.mxu0 %v123
    %151 = vmatpush.msra.mxu0 %v122
    %152 = vmatpush.msra.mxu0 %v121
    %153 = vmatmul.f32.gmra.mxu0 %v120
    %v154 = vpop.f32.mrf.mxu0
    %v155 = vadd.f32 0.0, %v154
    %156 = vdwg.mxu0
    %v157 = vld [vmem:[#allocation5 + $0x202] sm:$0x1]
    %v158 = vld [vmem:[#allocation5 + $0x203] sm:$0x1]
    %v159 = vrot.slane %v155, 4
    %v160 = vadd.f32 %v155, %v159
    %v161 = vrot.slane %v160, 2
    %v162 = vadd.f32 %v160, %v161
    %v163 = vrot.slane %v162, 1
    %v164 = vadd.f32 %v162, %v163
    %v165 = vmul.f32 %v164, %v93
    %v166 = vsub.f32 %v155, %v165
    %v167 = vmul.f32 %v166, %v166
    %v168 = vrot.slane %v167, 4
    %v169 = vadd.f32 %v167, %v168
    %v170 = vrot.slane %v169, 2
    %v171 = vadd.f32 %v169, %v170
    %v172 = vrot.slane %v171, 1
    %v173 = vadd.f32 %v171, %v172
    %v174 = vmul.f32 %v173, %v93
    %v175 = vadd.f32 %v174, 1e-05
    %v176 = vrsqrt.pop %v175
    %v177 = vmul.f32 %v176, %v175
    %v178 = vmul.f32 %v177, %v176
    %v179 = vmul.f32 0.5, %v178
    %v180 = vsub.f32 1.5, %v179
    %v181 = vmul.f32 %v176, %v180
    %vm182 = vweird.f32 %v175
    %vm183 = vweird.f32 %v176
    %vm184 = vmor %vm182, %vm183
    %v185 = vsel %vm184, %v176, %v181
    %v186 = vmul.f32 %v157, %v185
    %v187 = vperm.slane %v186, 0
    %v188 = vmul.f32 %v166, %v187
    %v189 = vperm.slane %v158, 0
    %v190 = vadd.f32 %v188, %v189
    %v191 = vmax.f32 %v190, 0.0
    %v192 = vld [vmem:[#allocation5 + $0x100] sm:$0xff]
    %v193 = vld [vmem:[#allocation5 + $0x108] sm:$0xff]
    %v194 = vld [vmem:[#allocation5 + $0x110] sm:$0xff]
    %v195 = vld [vmem:[#allocation5 + $0x118] sm:$0xff]
    %v196 = vld [vmem:[#allocation5 + $0x120] sm:$0xff]
    %v197 = vld [vmem:[#allocation5 + $0x128] sm:$0xff]
    %v198 = vld [vmem:[#allocation5 + $0x130] sm:$0xff]
    %v199 = vld [vmem:[#allocation5 + $0x138] sm:$0xff]
    %v200 = vld [vmem:[#allocation5 + $0x140] sm:$0xff]
    %v201 = vld [vmem:[#allocation5 + $0x148] sm:$0xff]
    %v202 = vld [vmem:[#allocation5 + $0x150] sm:$0xff]
    %v203 = vld [vmem:[#allocation5 + $0x158] sm:$0xff]
    %v204 = vld [vmem:[#allocation5 + $0x160] sm:$0xff]
    %v205 = vld [vmem:[#allocation5 + $0x168] sm:$0xff]
    %v206 = vld [vmem:[#allocation5 + $0x170] sm:$0xff]
    %v207 = vld [vmem:[#allocation5 + $0x178] sm:$0xff]
    %208 = vmatpush.msra.mxu0 %v207
    %209 = vmatpush.msra.mxu0 %v206
    %210 = vmatpush.msra.mxu0 %v205
    %211 = vmatpush.msra.mxu0 %v204
    %212 = vmatpush.msra.mxu0 %v203
    %213 = vmatpush.msra.mxu0 %v202
    %214 = vmatpush.msra.mxu0 %v201
    %215 = vmatpush.msra.mxu0 %v200
    %216 = vmatpush.msra.mxu0 %v199
    %217 = vmatpush.msra.mxu0 %v198
    %218 = vmatpush.msra.mxu0 %v197
    %219 = vmatpush.msra.mxu0 %v196
    %220 = vmatpush.msra.mxu0 %v195
    %221 = vmatpush.msra.mxu0 %v194
    %222 = vmatpush.msra.mxu0 %v193
    %223 = vmatpush.msra.mxu0 %v192
    %224 = vmatmul.f32.gmra.mxu0 %v191
    %v225 = vpop.f32.mrf.mxu0
    %v226 = vadd.f32 0.0, %v225
    %227 = vdwg.mxu0
    %v228 = vld [vmem:[#allocation5 + $0x204] sm:$0x1]
    %v229 = vld [vmem:[#allocation5 + $0x205] sm:$0x1]
    %v230 = vrot.slane %v226, 4
    %v231 = vadd.f32 %v226, %v230
    %v232 = vrot.slane %v231, 2
    %v233 = vadd.f32 %v231, %v232
    %v234 = vrot.slane %v233, 1
    %v235 = vadd.f32 %v233, %v234
    %v236 = vmul.f32 %v235, %v93
    %v237 = vsub.f32 %v226, %v236
    %v238 = vmul.f32 %v237, %v237
    %v239 = vrot.slane %v238, 4
    %v240 = vadd.f32 %v238, %v239
    %v241 = vrot.slane %v240, 2
    %v242 = vadd.f32 %v240, %v241
    %v243 = vrot.slane %v242, 1
    %v244 = vadd.f32 %v242, %v243
    %v245 = vmul.f32 %v244, %v93
    %v246 = vadd.f32 %v245, 1e-05
    %v247 = vrsqrt.pop %v246
    %v248 = vmul.f32 %v247, %v246
    %v249 = vmul.f32 %v248, %v247
    %v250 = vmul.f32 0.5, %v249
    %v251 = vsub.f32 1.5, %v250
    %v252 = vmul.f32 %v247, %v251
    %vm253 = vweird.f32 %v246
    %vm254 = vweird.f32 %v247
    %vm255 = vmor %vm253, %vm254
    %v256 = vsel %vm255, %v247, %v252
    %v257 = vmul.f32 %v228, %v256
    %v258 = vperm.slane %v257, 0
    %v259 = vmul.f32 %v237, %v258
    %v260 = vperm.slane %v229, 0
    %v261 = vadd.f32 %v259, %v260
    %v262 = vmax.f32 %v261, 0.0
    %v263 = vld [vmem:[#allocation5 + $0x180] sm:$0xff]
    %v264 = vld [vmem:[#allocation5 + $0x188] sm:$0xff]
    %v265 = vld [vmem:[#allocation5 + $0x190] sm:$0xff]
    %v266 = vld [vmem:[#allocation5 + $0x198] sm:$0xff]
    %v267 = vld [vmem:[#allocation5 + $0x1a0] sm:$0xff]
    %v268 = vld [vmem:[#allocation5 + $0x1a8] sm:$0xff]
    %v269 = vld [vmem:[#allocation5 + $0x1b0] sm:$0xff]
    %v270 = vld [vmem:[#allocation5 + $0x1b8] sm:$0xff]
    %v271 = vld [vmem:[#allocation5 + $0x1c0] sm:$0xff]
    %v272 = vld [vmem:[#allocation5 + $0x1c8] sm:$0xff]
    %v273 = vld [vmem:[#allocation5 + $0x1d0] sm:$0xff]
    %v274 = vld [vmem:[#allocation5 + $0x1d8] sm:$0xff]
    %v275 = vld [vmem:[#allocation5 + $0x1e0] sm:$0xff]
    %v276 = vld [vmem:[#allocation5 + $0x1e8] sm:$0xff]
    %v277 = vld [vmem:[#allocation5 + $0x1f0] sm:$0xff]
    %v278 = vld [vmem:[#allocation5 + $0x1f8] sm:$0xff]
    %v279 = vld [vmem:[#allocation5 + $0x206] sm:$0x1]
    %v280 = vperm.slane %v279, 0
    %281 = vmatpush.msra.mxu0 %v278
    %282 = vmatpush.msra.mxu0 %v277
    %283 = vmatpush.msra.mxu0 %v276
    %284 = vmatpush.msra.mxu0 %v275
    %285 = vmatpush.msra.mxu0 %v274
    %286 = vmatpush.msra.mxu0 %v273
    %287 = vmatpush.msra.mxu0 %v272
    %288 = vmatpush.msra.mxu0 %v271
    %289 = vmatpush.msra.mxu0 %v270
    %290 = vmatpush.msra.mxu0 %v269
    %291 = vmatpush.msra.mxu0 %v268
    %292 = vmatpush.msra.mxu0 %v267
    %293 = vmatpush.msra.mxu0 %v266
    %294 = vmatpush.msra.mxu0 %v265
    %295 = vmatpush.msra.mxu0 %v264
    %296 = vmatpush.msra.mxu0 %v263
    %297 = vmatmul.f32.gmra.mxu0 %v262
    %v298 = vpop.f32.mrf.mxu0
    %v299 = vadd.f32 %v280, %v298
    %300 = vdwg.mxu0
    %301 = vmax.xlane.f32.xlu0 %v299
    %v302 = vpop.xlane.xlu0 %301
    %v303 = vsub.f32 %v299, %v302
    %v304 = vmul.f32 %v303, 1.442695
    %v305 = vpow.pop %v304
    %306 = vadd.xlane.f32.xlu0 %v305
    %v307 = vpop.xlane.xlu0 %306
    %v308 = vrcp.pop %v307
    %v309 = vmul.f32 %v307, %v308
    %v310 = vsub.f32 1.0, %v309
    %v311 = vmul.f32 %v308, %v310
    %v312 = vadd.f32 %v308, %v311
    %vm313 = vweird.f32 %v307
    %vm314 = vweird.f32 %v308
    %vm315 = vmor %vm313, %vm314
    %v316 = vsel %vm315, %v308, %v312
    %v317 = vand.u32 2147483647, %v307
    %vm318 = vcmp.eq.f32.partialorder %v317, 8.507059e+37
    %v319 = vand.u32 %v307, 2147483648
    %v320 = vor.u32 1.1754944e-38, %v319
    %v321 = vsel %vm318, %v320, %v316
    %v322 = vmul.f32 %v305, %v321
    %323 = vst [vmem:[#allocation7] sm:$0xff] %v322
    // Predicated region
    $region18: #{tpu_custom_call.1} parent=1 // pred_check
      _
    $region19: #{tpu_custom_call.1} parent=1 // pred_check_branch
      %325 = sbr.rel (0) target = $region21
    $region20: #{tpu_custom_call.1} parent=1 // pred_region
      %327 = vsyncadd [#allocation4], 0
      %s329 = sshll.u32 [#allocation7], 4
      %s330 = int_to_ptr.vmem [resolvable:$true] %s329
      %s331 = sshll.u32 %s2, 4
      %s332 = int_to_ptr.hbm [resolvable:$true] %s331
      %334 = dma.vmem_to_hbm [thread:$0]  %s330, 128, %s332, [#allocation4]
    $region21: #{tpu_custom_call.1} parent=1 // pred_fallthru
      _
    // Predicated region
    $region22: #{tpu_custom_call.1} parent=1 // pred_check
      _
    $region23: #{tpu_custom_call.1} parent=1 // pred_check_branch
      %336 = sbr.rel (0) target = $region25
    $region24: #{tpu_custom_call.1} parent=1 // pred_region
      %338 = dma.done [#allocation4], 128
    $region25: #{tpu_custom_call.1} parent=1 // pred_fallthru
      _
    %339 = vsyncpa [#allocation3], 1
    %340 = vsyncpa [#allocation6], 1
    %341 = vsyncpa [#allocation4], 1

</llo_original>
